<compile_context>
chip_gen: v5e
topology: v5e:2x2
jax: 0.10.0
libtpu: 0.0.40
codegen_flags: <defaults>
</compile_context>

<pallas_src>
import jax
import jax.numpy as jnp
from jax.experimental import pallas as pl
from jax.experimental.pallas import tpu as pltpu

EPS = 1e-5  # torch.nn.LayerNorm default


def _round_up(x, m):
    return ((x + m - 1) // m) * m


def _vmem_capacity_bytes():
    """Physical per-core VMEM (64 MiB on v7x, 128 MiB on v5e/v6e)."""
    try:
        cap = getattr(pltpu.get_tpu_info(), "vmem_capacity_bytes", None)
        if cap:
            return int(cap)
    except Exception:
        pass
    return 64 * 1024 * 1024  # conservative default (v7x per-TC)


def _prenorm_kernel(x_ref, gamma_ref, beta_ref, w_ref, bias_ref, o_ref):
    # x_ref: (TM, D)   gamma/beta/bias: (1, D)   w: (D, D)
    # D is the true (unpadded) feature width; Mosaic masks the lane reduction
    # and zero-pads MXU operands internally.
    x = x_ref[...].astype(jnp.float32)

    # --- LayerNorm statistics in f32 (biased variance, like torch) ---
    mean = jnp.mean(x, axis=-1, keepdims=True)
    centered = x - mean
    var = jnp.mean(centered * centered, axis=-1, keepdims=True)
    xhat = centered * jax.lax.rsqrt(var + EPS)            # rsqrt -> EUP slot

    normed = (xhat * gamma_ref[...].astype(jnp.float32)
              + beta_ref[...].astype(jnp.float32))

    # --- fn = Linear(D, D): MXU operands in the weight dtype, f32 accumulation ---
    y = jnp.dot(normed.astype(w_ref.dtype), w_ref[...],
                preferred_element_type=jnp.float32)
    y = y + bias_ref[...].astype(jnp.float32)

    o_ref[...] = y.astype(o_ref.dtype)


def prenorm_forward(x, gamma, beta, w, bias, *, matmul_dtype=jnp.bfloat16):
    """PreNorm forward: LayerNorm over the last axis, then Linear(D, D).

    x: (B, N, D);  gamma/beta/bias: (D,);  w: (D_in, D_out) = (D, D)
    (i.e. the transpose of torch's Linear.weight).
    matmul_dtype: dtype fed to the MXU (bf16 fast path by default; pass
    jnp.float32 for an exact-f32 matmul).  Output keeps x.dtype.
    """
    B, N, D = x.shape
    M = B * N

    act_isz = x.dtype.itemsize
    sub = max(8, 32 // act_isz)              # packed-sublane multiple (8/16/32)
    lanes = _round_up(D, 128)                # per-row VMEM footprint (lane-padded)

    w2 = w.astype(matmul_dtype)              # cast once in the wrapper (not per-tile)
    w_isz = w2.dtype.itemsize
    w_sub = max(8, 32 // w_isz)
    # Conservative: count the weight as if double-buffered (fallback path).
    w_bytes = 2 * _round_up(D, w_sub) * lanes * w_isz
    param_bytes = 3 * 2 * 8 * lanes * 4      # gamma/beta/bias tiles (tiny)

    budget = int(0.8 * _vmem_capacity_bytes())   # ~51 MiB v7x, ~102 MiB v5e/v6e

    def footprint(tm):
        act = 2 * 2 * tm * lanes * act_isz   # in + out tiles, double-buffered
        work = 3 * tm * lanes * 4            # f32 temporaries inside the body
        return act + work + w_bytes + param_bytes

    # Row tile: ~2 MiB of f32 work per step, >= 4 grid steps when M permits
    # (keeps both v7x TensorCores busy), shrunk until it fits the VMEM budget.
    TM = max(sub, (2 * 1024 * 1024) // (4 * D))
    TM = min(TM, 4096)
    TM = min(TM, _round_up(pl.cdiv(M, 4), sub))
    TM = min(TM, _round_up(M, sub))
    TM = _round_up(max(TM, sub), sub)
    while TM > sub and footprint(TM) > budget:
        TM = _round_up(TM // 2, sub)

    grid = (pl.cdiv(M, TM),)                 # ragged last block allowed (no M pad)
    vmem_limit = int(min(budget, max(2 * footprint(TM), 32 * 1024 * 1024)))

    # No feature padding: reshape (B, N, D) -> (M, D) is a free collapse of
    # contiguous leading dims; params reshaped to (1, D) rows.
    x2 = x.reshape(M, D)
    gamma2 = jnp.reshape(gamma, (1, D))
    beta2 = jnp.reshape(beta, (1, D))
    bias2 = jnp.reshape(bias, (1, D))

    cost = pl.CostEstimate(
        flops=2 * M * D * D + 8 * M * D,
        transcendentals=M,
        bytes_accessed=2 * M * D * act_isz + D * D * w_isz + 3 * D * 4,
    )

    def build(single_buffer_consts):
        def const_spec(shape):
            if single_buffer_consts:
                # Constant index_map (i -> (0,0)): one buffer is enough; halves
                # resident-weight VMEM (important on v7x's 64 MiB).
                return pl.BlockSpec(shape, lambda i: (0, 0),
                                    pipeline_mode=pl.Buffered(1))
            return pl.BlockSpec(shape, lambda i: (0, 0))

        return pl.pallas_call(
            _prenorm_kernel,
            out_shape=jax.ShapeDtypeStruct((M, D), x.dtype),
            grid=grid,
            in_specs=[
                pl.BlockSpec((TM, D), lambda i: (i, 0)),   # x tiles (pipelined)
                const_spec((1, D)),                         # gamma (resident)
                const_spec((1, D)),                         # beta  (resident)
                const_spec((D, D)),                         # W     (resident)
                const_spec((1, D)),                         # bias  (resident)
            ],
            out_specs=pl.BlockSpec((TM, D), lambda i: (i, 0)),
            compiler_params=pltpu.CompilerParams(
                dimension_semantics=("parallel",),
                vmem_limit_bytes=vmem_limit,
            ),
            cost_estimate=cost,
        )

    args = (x2, gamma2, beta2, w2, bias2)
    try:
        out = build(True)(*args)
    except Exception:
        # Older Mosaic builds may reject pl.Buffered(1); default buffering works.
        out = build(False)(*args)

    return out.reshape(B, N, D)


def _reference(x, gamma, beta, w, bias):
    xf = x.astype(jnp.float32)
    mean = jnp.mean(xf, axis=-1, keepdims=True)
    var = jnp.mean((xf - mean) ** 2, axis=-1, keepdims=True)
    normed = (xf - mean) * jax.lax.rsqrt(var + EPS) * gamma + beta
    return normed @ w.astype(jnp.float32) + bias


if __name__ == "__main__":
    key = jax.random.PRNGKey(0)
    B, N, D = 2, 50, 32   # M = 100 -> exercises the ragged last row-block

    k_x, k_w, k_b, k_g, k_be = jax.random.split(key, 5)
    x = jax.random.normal(k_x, (B, N, D), dtype=jnp.float32)

    # LayerNorm params (perturbed from default init so they are actually tested)
    gamma = 1.0 + 0.1 * jax.random.normal(k_g, (D,), dtype=jnp.float32)
    beta = 0.1 * jax.random.normal(k_be, (D,), dtype=jnp.float32)

    # fn = Linear(D, D); w laid out as (D_in, D_out)
    w = jax.random.normal(k_w, (D, D), dtype=jnp.float32) / jnp.sqrt(D)
    bias = jax.random.normal(k_b, (D,), dtype=jnp.float32) * 0.01

    ref = _reference(x, gamma, beta, w, bias)

    # Exact-f32 escape hatch (tight check).
    out_f32 = jax.block_until_ready(
        prenorm_forward(x, gamma, beta, w, bias, matmul_dtype=jnp.float32))
    assert out_f32.shape == (B, N, D)
    assert jnp.allclose(out_f32, ref, atol=1e-4, rtol=1e-4)

    # Default path: bf16 MXU operands (fast MXU path on v5e/v6e/v7x).
    out_bf = jax.block_until_ready(prenorm_forward(x, gamma, beta, w, bias))
    assert jnp.allclose(out_bf, ref, atol=5e-2, rtol=5e-2)

    # bf16 activations in HBM (halves activation traffic); stats still f32.
    out_act_bf16 = jax.block_until_ready(
        prenorm_forward(x.astype(jnp.bfloat16), gamma, beta,
                        w.astype(jnp.bfloat16), bias))
    assert out_act_bf16.dtype == jnp.bfloat16
    assert jnp.allclose(out_act_bf16.astype(jnp.float32), ref, atol=1e-1, rtol=1e-1)

    print("KERNEL_OK")
</pallas_src>

<mosaic_0001>
module attributes {stable_mosaic.version = 11 : i64} {
  func.func @_prenorm_kernel(%arg0: i32, %arg1: memref<32x32xf32, #tpu.memory_space<vmem>>, %arg2: memref<1x32xf32, #tpu.memory_space<vmem>>, %arg3: memref<1x32xf32, #tpu.memory_space<vmem>>, %arg4: memref<32x32xf32, #tpu.memory_space<vmem>>, %arg5: memref<1x32xf32, #tpu.memory_space<vmem>>, %arg6: memref<32x32xf32, #tpu.memory_space<vmem>>) attributes {dimension_semantics = [#tpu.dimension_semantics<parallel>], iteration_bounds = array<i64: 4>, scalar_prefetch = 0 : i64, scratch_operands = 0 : i64, tpu.core_type = #tpu.core_type<tc>, window_params = [{transform_indices = @transform_0, window_bounds = array<i64: 32, 32>}, {pipeline_mode = #tpu.pipeline_mode<synchronous>, transform_indices = @transform_1, window_bounds = array<i64: 1, 32>}, {pipeline_mode = #tpu.pipeline_mode<synchronous>, transform_indices = @transform_2, window_bounds = array<i64: 1, 32>}, {pipeline_mode = #tpu.pipeline_mode<synchronous>, transform_indices = @transform_3, window_bounds = array<i64: 32, 32>}, {pipeline_mode = #tpu.pipeline_mode<synchronous>, transform_indices = @transform_4, window_bounds = array<i64: 1, 32>}, {transform_indices = @transform_5, window_bounds = array<i64: 32, 32>}]} {
    %c0 = arith.constant 0 : index
    %c0_0 = arith.constant 0 : index
    %0 = vector.load %arg1[%c0, %c0_0] : memref<32x32xf32, #tpu.memory_space<vmem>>, vector<32x32xf32>
    %cst = arith.constant dense<0.000000e+00> : vector<32xf32>
    %1 = vector.multi_reduction <add>, %0, %cst [1] : vector<32x32xf32> to vector<32xf32>
    %2 = vector.shape_cast %1 : vector<32xf32> to vector<32x1xf32>
    %cst_1 = arith.constant 3.200000e+01 : f32
    %3 = vector.broadcast %cst_1 : f32 to vector<32x1xf32>
    %4 = arith.divf %2, %3 : vector<32x1xf32>
    %5 = vector.broadcast %4 : vector<32x1xf32> to vector<32x32xf32>
    %6 = arith.subf %0, %5 : vector<32x32xf32>
    %7 = arith.mulf %6, %6 : vector<32x32xf32>
    %cst_2 = arith.constant dense<0.000000e+00> : vector<32xf32>
    %8 = vector.multi_reduction <add>, %7, %cst_2 [1] : vector<32x32xf32> to vector<32xf32>
    %9 = vector.shape_cast %8 : vector<32xf32> to vector<32x1xf32>
    %cst_3 = arith.constant 3.200000e+01 : f32
    %10 = vector.broadcast %cst_3 : f32 to vector<32x1xf32>
    %11 = arith.divf %9, %10 : vector<32x1xf32>
    %cst_4 = arith.constant 9.99999974E-6 : f32
    %12 = vector.broadcast %cst_4 : f32 to vector<32x1xf32>
    %13 = arith.addf %11, %12 : vector<32x1xf32>
    %14 = math.rsqrt %13 : vector<32x1xf32>
    %15 = vector.broadcast %14 : vector<32x1xf32> to vector<32x32xf32>
    %16 = arith.mulf %6, %15 : vector<32x32xf32>
    %c0_5 = arith.constant 0 : index
    %c0_6 = arith.constant 0 : index
    %17 = vector.load %arg2[%c0_5, %c0_6] : memref<1x32xf32, #tpu.memory_space<vmem>>, vector<1x32xf32>
    %18 = vector.broadcast %17 : vector<1x32xf32> to vector<32x32xf32>
    %19 = arith.mulf %16, %18 : vector<32x32xf32>
    %c0_7 = arith.constant 0 : index
    %c0_8 = arith.constant 0 : index
    %20 = vector.load %arg3[%c0_7, %c0_8] : memref<1x32xf32, #tpu.memory_space<vmem>>, vector<1x32xf32>
    %21 = vector.broadcast %20 : vector<1x32xf32> to vector<32x32xf32>
    %22 = arith.addf %19, %21 : vector<32x32xf32>
    %c0_9 = arith.constant 0 : index
    %c0_10 = arith.constant 0 : index
    %23 = vector.load %arg4[%c0_9, %c0_10] : memref<32x32xf32, #tpu.memory_space<vmem>>, vector<32x32xf32>
    %cst_11 = arith.constant dense<0.000000e+00> : vector<32x32xf32>
    %24 = tpu.matmul %22, %23, %cst_11 {dimension_numbers = #tpu.dot_dimension_numbers<[1], [0], [0], [1], [0, 0, 1, 1], [], []>} : vector<32x32xf32>, vector<32x32xf32>, vector<32x32xf32> -> vector<32x32xf32>
    %c0_12 = arith.constant 0 : index
    %c0_13 = arith.constant 0 : index
    %25 = vector.load %arg5[%c0_12, %c0_13] : memref<1x32xf32, #tpu.memory_space<vmem>>, vector<1x32xf32>
    %26 = vector.broadcast %25 : vector<1x32xf32> to vector<32x32xf32>
    %27 = arith.addf %24, %26 : vector<32x32xf32>
    %c0_14 = arith.constant 0 : index
    %c0_15 = arith.constant 0 : index
    %28 = vector.load %arg6[%c0_14, %c0_15] : memref<32x32xf32, #tpu.memory_space<vmem>>, vector<32x32xf32>
    tpu.vector_store %arg6[%c0_14, %c0_15], %27 {strides = array<i32>} : memref<32x32xf32, #tpu.memory_space<vmem>>, vector<32x32xf32>,
    return
  }
  func.func @transform_0(%arg0: i32) -> (i32, i32) {
    %c0_i32 = arith.constant 0 : i32
    %c0_i32_0 = arith.constant 0 : i32
    return %arg0, %c0_i32 : i32, i32
  }
  func.func @transform_1(%arg0: i32) -> (i32, i32) {
    %c0_i32 = arith.constant 0 : i32
    %c0_i32_0 = arith.constant 0 : i32
    %c0_i32_1 = arith.constant 0 : i32
    return %c0_i32, %c0_i32_0 : i32, i32
  }
  func.func @transform_2(%arg0: i32) -> (i32, i32) {
    %c0_i32 = arith.constant 0 : i32
    %c0_i32_0 = arith.constant 0 : i32
    %c0_i32_1 = arith.constant 0 : i32
    return %c0_i32, %c0_i32_0 : i32, i32
  }
  func.func @transform_3(%arg0: i32) -> (i32, i32) {
    %c0_i32 = arith.constant 0 : i32
    %c0_i32_0 = arith.constant 0 : i32
    %c0_i32_1 = arith.constant 0 : i32
    return %c0_i32, %c0_i32_0 : i32, i32
  }
  func.func @transform_4(%arg0: i32) -> (i32, i32) {
    %c0_i32 = arith.constant 0 : i32
    %c0_i32_0 = arith.constant 0 : i32
    %c0_i32_1 = arith.constant 0 : i32
    return %c0_i32, %c0_i32_0 : i32, i32
  }
  func.func @transform_5(%arg0: i32) -> (i32, i32) {
    %c0_i32 = arith.constant 0 : i32
    %c0_i32_0 = arith.constant 0 : i32
    return %arg0, %c0_i32 : i32, i32
  }
}

module attributes {stable_mosaic.version = 11 : i64} {
  func.func @_prenorm_kernel(%arg0: i32, %arg1: memref<32x32xf32, #tpu.memory_space<vmem>>, %arg2: memref<1x32xf32, #tpu.memory_space<vmem>>, %arg3: memref<1x32xf32, #tpu.memory_space<vmem>>, %arg4: memref<32x32xf32, #tpu.memory_space<vmem>>, %arg5: memref<1x32xf32, #tpu.memory_space<vmem>>, %arg6: memref<32x32xf32, #tpu.memory_space<vmem>>) attributes {dimension_semantics = [#tpu.dimension_semantics<parallel>], iteration_bounds = array<i64: 4>, scalar_prefetch = 0 : i64, scratch_operands = 0 : i64, tpu.core_type = #tpu.core_type<tc>, window_params = [{transform_indices = @transform_0, window_bounds = array<i64: 32, 32>}, {pipeline_mode = #tpu.pipeline_mode<synchronous>, transform_indices = @transform_1, window_bounds = array<i64: 1, 32>}, {pipeline_mode = #tpu.pipeline_mode<synchronous>, transform_indices = @transform_2, window_bounds = array<i64: 1, 32>}, {pipeline_mode = #tpu.pipeline_mode<synchronous>, transform_indices = @transform_3, window_bounds = array<i64: 32, 32>}, {pipeline_mode = #tpu.pipeline_mode<synchronous>, transform_indices = @transform_4, window_bounds = array<i64: 1, 32>}, {transform_indices = @transform_5, window_bounds = array<i64: 32, 32>}]} {
    %c0 = arith.constant 0 : index
    %c0_0 = arith.constant 0 : index
    %0 = vector.load %arg1[%c0, %c0_0] : memref<32x32xf32, #tpu.memory_space<vmem>>, vector<32x32xf32>
    %cst = arith.constant dense<0.000000e+00> : vector<32xf32>
    %1 = vector.multi_reduction <add>, %0, %cst [1] : vector<32x32xf32> to vector<32xf32>
    %2 = vector.shape_cast %1 : vector<32xf32> to vector<32x1xf32>
    %cst_1 = arith.constant 3.200000e+01 : f32
    %3 = vector.broadcast %cst_1 : f32 to vector<32x1xf32>
    %4 = arith.divf %2, %3 : vector<32x1xf32>
    %5 = vector.broadcast %4 : vector<32x1xf32> to vector<32x32xf32>
    %6 = arith.subf %0, %5 : vector<32x32xf32>
    %7 = arith.mulf %6, %6 : vector<32x32xf32>
    %cst_2 = arith.constant dense<0.000000e+00> : vector<32xf32>
    %8 = vector.multi_reduction <add>, %7, %cst_2 [1] : vector<32x32xf32> to vector<32xf32>
    %9 = vector.shape_cast %8 : vector<32xf32> to vector<32x1xf32>
    %cst_3 = arith.constant 3.200000e+01 : f32
    %10 = vector.broadcast %cst_3 : f32 to vector<32x1xf32>
    %11 = arith.divf %9, %10 : vector<32x1xf32>
    %cst_4 = arith.constant 9.99999974E-6 : f32
    %12 = vector.broadcast %cst_4 : f32 to vector<32x1xf32>
    %13 = arith.addf %11, %12 : vector<32x1xf32>
    %14 = math.rsqrt %13 : vector<32x1xf32>
    %15 = vector.broadcast %14 : vector<32x1xf32> to vector<32x32xf32>
    %16 = arith.mulf %6, %15 : vector<32x32xf32>
    %c0_5 = arith.constant 0 : index
    %c0_6 = arith.constant 0 : index
    %17 = vector.load %arg2[%c0_5, %c0_6] : memref<1x32xf32, #tpu.memory_space<vmem>>, vector<1x32xf32>
    %18 = vector.broadcast %17 : vector<1x32xf32> to vector<32x32xf32>
    %19 = arith.mulf %16, %18 : vector<32x32xf32>
    %c0_7 = arith.constant 0 : index
    %c0_8 = arith.constant 0 : index
    %20 = vector.load %arg3[%c0_7, %c0_8] : memref<1x32xf32, #tpu.memory_space<vmem>>, vector<1x32xf32>
    %21 = vector.broadcast %20 : vector<1x32xf32> to vector<32x32xf32>
    %22 = arith.addf %19, %21 : vector<32x32xf32>
    %c0_9 = arith.constant 0 : index
    %c0_10 = arith.constant 0 : index
    %23 = vector.load %arg4[%c0_9, %c0_10] : memref<32x32xf32, #tpu.memory_space<vmem>>, vector<32x32xf32>
    %cst_11 = arith.constant dense<0.000000e+00> : vector<32x32xf32>
    %24 = tpu.matmul %22, %23, %cst_11 {dimension_numbers = #tpu.dot_dimension_numbers<[1], [0], [0], [1], [0, 0, 1, 1], [], []>} : vector<32x32xf32>, vector<32x32xf32>, vector<32x32xf32> -> vector<32x32xf32>
    %c0_12 = arith.constant 0 : index
    %c0_13 = arith.constant 0 : index
    %25 = vector.load %arg5[%c0_12, %c0_13] : memref<1x32xf32, #tpu.memory_space<vmem>>, vector<1x32xf32>
    %26 = vector.broadcast %25 : vector<1x32xf32> to vector<32x32xf32>
    %27 = arith.addf %24, %26 : vector<32x32xf32>
    %c0_14 = arith.constant 0 : index
    %c0_15 = arith.constant 0 : index
    %28 = vector.load %arg6[%c0_14, %c0_15] : memref<32x32xf32, #tpu.memory_space<vmem>>, vector<32x32xf32>
    tpu.vector_store %arg6[%c0_14, %c0_15], %27 {strides = array<i32>} : memref<32x32xf32, #tpu.memory_space<vmem>>, vector<32x32xf32>,
    return
  }
  func.func @transform_0(%arg0: i32) -> (i32, i32) {
    %c0_i32 = arith.constant 0 : i32
    %c0_i32_0 = arith.constant 0 : i32
    return %arg0, %c0_i32 : i32, i32
  }
  func.func @transform_1(%arg0: i32) -> (i32, i32) {
    %c0_i32 = arith.constant 0 : i32
    %c0_i32_0 = arith.constant 0 : i32
    %c0_i32_1 = arith.constant 0 : i32
    return %c0_i32, %c0_i32_0 : i32, i32
  }
  func.func @transform_2(%arg0: i32) -> (i32, i32) {
    %c0_i32 = arith.constant 0 : i32
    %c0_i32_0 = arith.constant 0 : i32
    %c0_i32_1 = arith.constant 0 : i32
    return %c0_i32, %c0_i32_0 : i32, i32
  }
  func.func @transform_3(%arg0: i32) -> (i32, i32) {
    %c0_i32 = arith.constant 0 : i32
    %c0_i32_0 = arith.constant 0 : i32
    %c0_i32_1 = arith.constant 0 : i32
    return %c0_i32, %c0_i32_0 : i32, i32
  }
  func.func @transform_4(%arg0: i32) -> (i32, i32) {
    %c0_i32 = arith.constant 0 : i32
    %c0_i32_0 = arith.constant 0 : i32
    %c0_i32_1 = arith.constant 0 : i32
    return %c0_i32, %c0_i32_0 : i32, i32
  }
  func.func @transform_5(%arg0: i32) -> (i32, i32) {
    %c0_i32 = arith.constant 0 : i32
    %c0_i32_0 = arith.constant 0 : i32
    return %arg0, %c0_i32 : i32, i32
  }
}

</mosaic_0001>

<llo_original>
// kernel: tpu_custom_call.1
$region0: #{tpu_custom_call.1}
  #allocation0 [shape = 'u32[]', space=smem, size = 0x4, offset = 0x4, fixed_abs, tag = 'smem constant byte address 0x4 - core index']
  #allocation1 [shape = 'u32[72,128]{1,0:T(1,128)}', space=vmem, size = 0x9000, scoped, tag = 'internal scratch']
  %s0 = inlined_call_operand.vmem [shape: f32[100,32], index: 0, kind: input, shape index: {}]
  %s1 = inlined_call_operand.vmem [shape: f32[1,32], index: 1, kind: input, shape index: {}]
  %s2 = inlined_call_operand.vmem [shape: f32[1,32], index: 2, kind: input, shape index: {}]
  %s3 = inlined_call_operand.vmem [shape: f32[32,32], index: 3, kind: input, shape index: {}]
  %s4 = inlined_call_operand.vmem [shape: f32[1,32], index: 4, kind: input, shape index: {}]
  %s5 = inlined_call_operand.vmem [shape: f32[100,32], index: 5, kind: output, shape index: {}]
  %s6 = sld [smem:[#allocation0]]
  $region101: #{tpu_custom_call.1} parent=0
    _
  %s8 = ssub.s32 1, %s6
  %s9 = scalar_select 0, %s8, %s6
  $region1: #{tpu_custom_call.1} parent=0
    #allocation2 [shape = 'u8[32768]{0}', space=vmem, size = 0x8000, scoped, tag = 'output window, operand 0']
    loop: start=0, step=1, limit=6
    $region2: #{tpu_custom_call.1} parent=1 // loop_pre_header
      _
    $region3: #{tpu_custom_call.1} parent=1 // loop_header
      %s11 = sphi 0, %s15
      %p12 = scmp.ge.s32.totalorder %s11, 6
      %s21 = sphi 0, %s23
      %s24 = sphi 0, %s21
      %s25 = sphi 0, %s24
      %s41 = sphi 0, %s25
      %s45 = sphi 0, %s45
      %s47 = sphi 0, %s45
      %s48 = sphi 0, %s47
      %s62 = sphi 0, %s48
      %s66 = sphi 0, %s66
      %s68 = sphi 0, %s66
      %s69 = sphi 0, %s68
      %s83 = sphi 0, %s69
      %s87 = sphi 0, %s87
      %s89 = sphi 0, %s87
      %s90 = sphi 0, %s89
      %s104 = sphi 0, %s90
      %s108 = sphi 0, %s108
      %s110 = sphi 0, %s108
      %s111 = sphi 0, %s110
      %s125 = sphi 0, %s111
      %s131 = sphi 0, %s133
      %s134 = sphi 0, %s131
      %s135 = sphi 0, %s134
      %s151 = sphi 0, %s135
    $region4: #{tpu_custom_call.1} parent=1 // loop_header_branch
      %14 = sbr.rel (%p12) target = $region8
    $region5: #{tpu_custom_call.1} parent=1 // loop_body
      %s16 = ssub.s32 %s11, 1
      %s17 = ssub.s32 %s11, 2
      %s18 = sadd.s32 %s11, 1
      %s19 = ssub.s32 %s11, %s18
      %p20 = scmp.eq.s32.totalorder %s19, 0
      %s22 = sadd.s32 %s21, 1
      %s23 = scalar_select %p20, %s21, %s22
      %p26 = pneg %p20
      %p27 = scmp.eq.s32.totalorder %s11, 3
      %p28 = por %p26, %p27
      %p29 = scmp.ne.s32.totalorder %s21, %s24
      %p30 = scmp.eq.s32.totalorder %s11, 0
      %p31 = por %p29, %p30
      %p32 = scmp.ne.s32.totalorder %s21, %s24
      %p33 = scmp.eq.s32.totalorder %s16, 3
      %p34 = por %p32, %p33
      %p35 = scmp.ne.s32.totalorder %s24, %s25
      %p36 = scmp.eq.s32.totalorder %s16, 0
      %p37 = por %p35, %p36
      %p38 = scmp.ne.s32.totalorder %s24, %s25
      %p39 = scmp.eq.s32.totalorder %s17, 3
      %p40 = por %p38, %p39
      %p42 = scmp.ne.s32.totalorder %s25, %s41
      %p43 = scmp.eq.s32.totalorder %s17, 0
      %p44 = por %p42, %p43
      %s46 = sadd.s32 %s45, 1
      %p49 = scmp.eq.s32.totalorder %s11, 3
      %p50 = scmp.ne.s32.totalorder %s45, %s47
      %p51 = scmp.eq.s32.totalorder %s11, 0
      %p52 = por %p50, %p51
      %p53 = scmp.ne.s32.totalorder %s45, %s47
      %p54 = scmp.eq.s32.totalorder %s16, 3
      %p55 = por %p53, %p54
      %p56 = scmp.ne.s32.totalorder %s47, %s48
      %p57 = scmp.eq.s32.totalorder %s16, 0
      %p58 = por %p56, %p57
      %p59 = scmp.ne.s32.totalorder %s47, %s48
      %p60 = scmp.eq.s32.totalorder %s17, 3
      %p61 = por %p59, %p60
      %p63 = scmp.ne.s32.totalorder %s48, %s62
      %p64 = scmp.eq.s32.totalorder %s17, 0
      %p65 = por %p63, %p64
      %s67 = sadd.s32 %s66, 1
      %p70 = scmp.eq.s32.totalorder %s11, 3
      %p71 = scmp.ne.s32.totalorder %s66, %s68
      %p72 = scmp.eq.s32.totalorder %s11, 0
      %p73 = por %p71, %p72
      %p74 = scmp.ne.s32.totalorder %s66, %s68
      %p75 = scmp.eq.s32.totalorder %s16, 3
      %p76 = por %p74, %p75
      %p77 = scmp.ne.s32.totalorder %s68, %s69
      %p78 = scmp.eq.s32.totalorder %s16, 0
      %p79 = por %p77, %p78
      %p80 = scmp.ne.s32.totalorder %s68, %s69
      %p81 = scmp.eq.s32.totalorder %s17, 3
      %p82 = por %p80, %p81
      %p84 = scmp.ne.s32.totalorder %s69, %s83
      %p85 = scmp.eq.s32.totalorder %s17, 0
      %p86 = por %p84, %p85
      %s88 = sadd.s32 %s87, 1
      %p91 = scmp.eq.s32.totalorder %s11, 3
      %p92 = scmp.ne.s32.totalorder %s87, %s89
      %p93 = scmp.eq.s32.totalorder %s11, 0
      %p94 = por %p92, %p93
      %p95 = scmp.ne.s32.totalorder %s87, %s89
      %p96 = scmp.eq.s32.totalorder %s16, 3
      %p97 = por %p95, %p96
      %p98 = scmp.ne.s32.totalorder %s89, %s90
      %p99 = scmp.eq.s32.totalorder %s16, 0
      %p100 = por %p98, %p99
      %p101 = scmp.ne.s32.totalorder %s89, %s90
      %p102 = scmp.eq.s32.totalorder %s17, 3
      %p103 = por %p101, %p102
      %p105 = scmp.ne.s32.totalorder %s90, %s104
      %p106 = scmp.eq.s32.totalorder %s17, 0
      %p107 = por %p105, %p106
      %s109 = sadd.s32 %s108, 1
      %p112 = scmp.eq.s32.totalorder %s11, 3
      %p113 = scmp.ne.s32.totalorder %s108, %s110
      %p114 = scmp.eq.s32.totalorder %s11, 0
      %p115 = por %p113, %p114
      %p116 = scmp.ne.s32.totalorder %s108, %s110
      %p117 = scmp.eq.s32.totalorder %s16, 3
      %p118 = por %p116, %p117
      %p119 = scmp.ne.s32.totalorder %s110, %s111
      %p120 = scmp.eq.s32.totalorder %s16, 0
      %p121 = por %p119, %p120
      %p122 = scmp.ne.s32.totalorder %s110, %s111
      %p123 = scmp.eq.s32.totalorder %s17, 3
      %p124 = por %p122, %p123
      %p126 = scmp.ne.s32.totalorder %s111, %s125
      %p127 = scmp.eq.s32.totalorder %s17, 0
      %p128 = por %p126, %p127
      %s129 = ssub.s32 %s11, %s18
      %p130 = scmp.eq.s32.totalorder %s129, 0
      %s132 = sadd.s32 %s131, 1
      %s133 = scalar_select %p130, %s131, %s132
      %p136 = pneg %p130
      %p137 = scmp.eq.s32.totalorder %s11, 3
      %p138 = por %p136, %p137
      %p139 = scmp.ne.s32.totalorder %s131, %s134
      %p140 = scmp.eq.s32.totalorder %s11, 0
      %p141 = por %p139, %p140
      %p142 = scmp.ne.s32.totalorder %s131, %s134
      %p143 = scmp.eq.s32.totalorder %s16, 3
      %p144 = por %p142, %p143
      %p145 = scmp.ne.s32.totalorder %s134, %s135
      %p146 = scmp.eq.s32.totalorder %s16, 0
      %p147 = por %p145, %p146
      %p148 = scmp.ne.s32.totalorder %s134, %s135
      %p149 = scmp.eq.s32.totalorder %s17, 3
      %p150 = por %p148, %p149
      %p152 = scmp.ne.s32.totalorder %s135, %s151
      %p153 = scmp.eq.s32.totalorder %s17, 0
      %p154 = por %p152, %p153
      %p155 = scmp.le.s32.totalorder 1, %s11
      %p156 = scmp.lt.s32.totalorder %s11, 5
      %p157 = pnand %p155, %p156
      %p158 = pneg %p157
      // Predicated region
      $region9: #{tpu_custom_call.1} parent=5 // pred_check
        _
      $region10: #{tpu_custom_call.1} parent=5 // pred_check_branch
        %160 = sbr.rel (%p157) target = $region12
      $region11: #{tpu_custom_call.1} parent=5 // pred_region
        %s161 = ssub.s32 %s11, 1
        // Predicated region
        $region13: #{tpu_custom_call.1} parent=11 // pred_check
          %p162 = pneg %p58
        $region14: #{tpu_custom_call.1} parent=11 // pred_check_branch
          %164 = sbr.rel (%p162) target = $region16
        $region15: #{tpu_custom_call.1} parent=11 // pred_region
          _
        $region16: #{tpu_custom_call.1} parent=11 // pred_fallthru
          _
        // Predicated region
        $region17: #{tpu_custom_call.1} parent=11 // pred_check
          %p165 = pneg %p79
        $region18: #{tpu_custom_call.1} parent=11 // pred_check_branch
          %167 = sbr.rel (%p165) target = $region20
        $region19: #{tpu_custom_call.1} parent=11 // pred_region
          _
        $region20: #{tpu_custom_call.1} parent=11 // pred_fallthru
          _
        // Predicated region
        $region21: #{tpu_custom_call.1} parent=11 // pred_check
          %p168 = pneg %p100
        $region22: #{tpu_custom_call.1} parent=11 // pred_check_branch
          %170 = sbr.rel (%p168) target = $region24
        $region23: #{tpu_custom_call.1} parent=11 // pred_region
          _
        $region24: #{tpu_custom_call.1} parent=11 // pred_fallthru
          _
        // Predicated region
        $region25: #{tpu_custom_call.1} parent=11 // pred_check
          %p171 = pneg %p121
        $region26: #{tpu_custom_call.1} parent=11 // pred_check_branch
          %173 = sbr.rel (%p171) target = $region28
        $region27: #{tpu_custom_call.1} parent=11 // pred_region
          _
        $region28: #{tpu_custom_call.1} parent=11 // pred_fallthru
          _
      $region12: #{tpu_custom_call.1} parent=5 // pred_fallthru
        _
      %p174 = scmp.lt.s32.totalorder %s11, 4
      // Predicated region
      $region29: #{tpu_custom_call.1} parent=5 // pred_check
        %p175 = pneg %p174
      $region30: #{tpu_custom_call.1} parent=5 // pred_check_branch
        %177 = sbr.rel (%p175) target = $region32
      $region31: #{tpu_custom_call.1} parent=5 // pred_region
        // Predicated region
        $region33: #{tpu_custom_call.1} parent=31 // pred_check
          %p178 = pneg %p31
        $region34: #{tpu_custom_call.1} parent=31 // pred_check_branch
          %180 = sbr.rel (%p178) target = $region36
        $region35: #{tpu_custom_call.1} parent=31 // pred_region
          %s181 = smul.u32 4, %s11
          %s182 = ssub.s32 13, %s181
          %p183 = scmp.lt.s32.totalorder %s182, 4
          %s184 = scalar_select %p183, %s182, 4
          %s185 = smul.u32 8, %s184
          %p186 = scmp.lt.s32.totalorder %s181, 12
          %s187 = scalar_select %p186, %s181, 12
          %s188 = smul.addr %s187, 8
          %s189 = scalar_lea.vmem %s0, %s188
          %s190 = smul.u32 4, %s11
          %s191 = ssub.s32 13, %s190
          %p192 = scmp.lt.s32.totalorder %s191, 4
          %s193 = scalar_select %p192, %s191, 4
          %s194 = smul.u32 8, %s193
        $region36: #{tpu_custom_call.1} parent=31 // pred_fallthru
          _
      $region32: #{tpu_custom_call.1} parent=5 // pred_fallthru
        _
      %p195 = scmp.le.s32.totalorder 1, %s11
      %p196 = scmp.lt.s32.totalorder %s11, 5
      %p197 = pnand %p195, %p196
      %p198 = pneg %p197
      // Predicated region
      $region37: #{tpu_custom_call.1} parent=5 // pred_check
        _
      $region38: #{tpu_custom_call.1} parent=5 // pred_check_branch
        %200 = sbr.rel (%p197) target = $region40
      $region39: #{tpu_custom_call.1} parent=5 // pred_region
        %s201 = ssub.s32 %s11, 1
        %s202 = smul.u32 4, %s16
        %s203 = ssub.s32 13, %s202
        %p204 = scmp.lt.s32.totalorder %s203, 4
        %s205 = scalar_select %p204, %s203, 4
        %s206 = smul.u32 8, %s205
        %p207 = scmp.lt.s32.totalorder %s202, 12
        %s208 = scalar_select %p207, %s202, 12
        %s209 = smul.addr %s208, 8
        %s210 = scalar_lea.vmem %s0, %s209
        %p211 = pneg %p37
        %p212 = pneg %p34
        %p213 = pneg %p58
        %p214 = pneg %p55
        %p215 = pneg %p79
        %p216 = pneg %p76
        %p217 = pneg %p100
        %p218 = pneg %p97
        %p219 = pneg %p121
        %p220 = pneg %p118
        %p221 = pneg %p147
        %p222 = pneg %p144
        %s223 = sand.u32 %s134, 1
        %s224 = sand.u32 %s134, 1
        %s225 = smul.addr %s224, 32
        %s226 = scalar_lea.vmem [#allocation2], %s225
        %s227 = smul.u32 4, %s16
        %s228 = ssub.s32 13, %s227
        %p229 = scmp.lt.s32.totalorder %s228, 4
        %s230 = scalar_select %p229, %s228, 4
        %s231 = smul.u32 8, %s230
        %p232 = scmp.lt.s32.totalorder %s227, 12
        %s233 = scalar_select %p232, %s227, 12
        %s234 = smul.addr %s233, 8
        %s235 = scalar_lea.vmem %s0, %s234
        %s236 = smul.u32 4, %s16
        %s237 = ssub.s32 13, %s236
        %p238 = scmp.lt.s32.totalorder %s237, 4
        %s239 = scalar_select %p238, %s237, 4
        %s240 = smul.u32 8, %s239
        %s241 = smul.u32 4, %s16
        %s242 = ssub.s32 13, %s241
        %p243 = scmp.lt.s32.totalorder %s242, 4
        %s244 = scalar_select %p243, %s242, 4
        %s245 = smul.u32 8, %s244
        %v246 = vld [vmem:[%s235] sm:$0xff]
        %v247 = vld [vmem:[%s235 + $0x8] sm:$0xff]
        %v248 = vld [vmem:[%s235 + $0x10] sm:$0xff]
        %v249 = vld [vmem:[%s235 + $0x18] sm:$0xff]
        %vm250 = vcmask 261120
        %v251 = vsel %vm250, %v246, 0.0
        %252 = vadd.xlane.f32.xlu0 %v251
        %v253 = vpop.xlane.xlu0 %252
        %v254 = vsel %vm250, %v247, 0.0
        %255 = vadd.xlane.f32.xlu0 %v254
        %v256 = vpop.xlane.xlu0 %255
        %v257 = vsel %vm250, %v248, 0.0
        %258 = vadd.xlane.f32.xlu0 %v257
        %v259 = vpop.xlane.xlu0 %258
        %v260 = vsel %vm250, %v249, 0.0
        %261 = vadd.xlane.f32.xlu0 %v260
        %v262 = vpop.xlane.xlu0 %261
        %v263 = vrcp.pop 32.0
        %v264 = vmul.f32 32.0, %v263
        %v265 = vsub.f32 1.0, %v264
        %v266 = vmul.f32 %v263, %v265
        %v267 = vadd.f32 %v263, %v266
        %vm268 = vweird.f32 %v263
        %v269 = vsel %vm268, %v263, %v267
        %v270 = vmul.f32 %v253, %v269
        %v271 = vmul.f32 %v256, %v269
        %v272 = vmul.f32 %v259, %v269
        %v273 = vmul.f32 %v262, %v269
        %v274 = vsub.f32 %v246, %v270
        %v275 = vsub.f32 %v247, %v271
        %v276 = vsub.f32 %v248, %v272
        %v277 = vsub.f32 %v249, %v273
        %v278 = vmul.f32 %v274, %v274
        %v279 = vmul.f32 %v275, %v275
        %v280 = vmul.f32 %v276, %v276
        %v281 = vmul.f32 %v277, %v277
        %v282 = vsel %vm250, %v278, 0.0
        %283 = vadd.xlane.f32.xlu0 %v282
        %v284 = vpop.xlane.xlu0 %283
        %v285 = vsel %vm250, %v279, 0.0
        %286 = vadd.xlane.f32.xlu0 %v285
        %v287 = vpop.xlane.xlu0 %286
        %v288 = vsel %vm250, %v280, 0.0
        %289 = vadd.xlane.f32.xlu0 %v288
        %v290 = vpop.xlane.xlu0 %289
        %v291 = vsel %vm250, %v281, 0.0
        %292 = vadd.xlane.f32.xlu0 %v291
        %v293 = vpop.xlane.xlu0 %292
        %v294 = vmul.f32 %v284, %v269
        %v295 = vmul.f32 %v287, %v269
        %v296 = vmul.f32 %v290, %v269
        %v297 = vmul.f32 %v293, %v269
        %v298 = vadd.f32 %v294, 1e-05
        %v299 = vadd.f32 %v295, 1e-05
        %v300 = vadd.f32 %v296, 1e-05
        %v301 = vadd.f32 %v297, 1e-05
        %v302 = vrsqrt.pop %v298
        %v303 = vmul.f32 %v302, %v298
        %v304 = vmul.f32 %v303, %v302
        %v305 = vmul.f32 0.5, %v304
        %v306 = vsub.f32 1.5, %v305
        %v307 = vmul.f32 %v302, %v306
        %vm308 = vweird.f32 %v298
        %vm309 = vweird.f32 %v302
        %vm310 = vmor %vm308, %vm309
        %v311 = vsel %vm310, %v302, %v307
        %v312 = vrsqrt.pop %v299
        %v313 = vmul.f32 %v312, %v299
        %v314 = vmul.f32 %v313, %v312
        %v315 = vmul.f32 0.5, %v314
        %v316 = vsub.f32 1.5, %v315
        %v317 = vmul.f32 %v312, %v316
        %vm318 = vweird.f32 %v299
        %vm319 = vweird.f32 %v312
        %vm320 = vmor %vm318, %vm319
        %v321 = vsel %vm320, %v312, %v317
        %v322 = vrsqrt.pop %v300
        %v323 = vmul.f32 %v322, %v300
        %v324 = vmul.f32 %v323, %v322
        %v325 = vmul.f32 0.5, %v324
        %v326 = vsub.f32 1.5, %v325
        %v327 = vmul.f32 %v322, %v326
        %vm328 = vweird.f32 %v300
        %vm329 = vweird.f32 %v322
        %vm330 = vmor %vm328, %vm329
        %v331 = vsel %vm330, %v322, %v327
        %v332 = vrsqrt.pop %v301
        %v333 = vmul.f32 %v332, %v301
        %v334 = vmul.f32 %v333, %v332
        %v335 = vmul.f32 0.5, %v334
        %v336 = vsub.f32 1.5, %v335
        %v337 = vmul.f32 %v332, %v336
        %vm338 = vweird.f32 %v301
        %vm339 = vweird.f32 %v332
        %vm340 = vmor %vm338, %vm339
        %v341 = vsel %vm340, %v332, %v337
        %v342 = vmul.f32 %v274, %v311
        %v343 = vmul.f32 %v275, %v321
        %v344 = vmul.f32 %v276, %v331
        %v345 = vmul.f32 %v277, %v341
        %v346 = vld [vmem:[%s1] sm:$0x1]
        %v348 = vperm.slane %v346, 0
        %v350 = vmul.f32 %v342, %v348
        %v351 = vmul.f32 %v343, %v348
        %v352 = vmul.f32 %v344, %v348
        %v353 = vmul.f32 %v345, %v348
        %v354 = vld [vmem:[%s2] sm:$0x1]
        %v356 = vperm.slane %v354, 0
        %v358 = vadd.f32 %v350, %v356
        %v359 = vadd.f32 %v351, %v356
        %v360 = vadd.f32 %v352, %v356
        %v361 = vadd.f32 %v353, %v356
        %v362 = vld [vmem:[%s3] sm:$0xff]
        %v363 = vld [vmem:[%s3 + $0x8] sm:$0xff]
        %v364 = vld [vmem:[%s3 + $0x10] sm:$0xff]
        %v365 = vld [vmem:[%s3 + $0x18] sm:$0xff]
        %v366 = vld [vmem:[%s4] sm:$0x1]
        %v368 = vperm.slane %v366, 0
        %v371 = vsel %vm250, %v358, 0
        %v374 = vsel %vm250, %v359, 0
        %v377 = vsel %vm250, %v360, 0
        %v380 = vsel %vm250, %v361, 0
        %382 = vmatpush.msra.mxu0 0.0
        %383 = vmatpush.msra.mxu0 0.0
        %384 = vmatpush.msra.mxu0 0.0
        %385 = vmatpush.msra.mxu0 0.0
        %386 = vmatpush.msra.mxu0 0.0
        %387 = vmatpush.msra.mxu0 0.0
        %388 = vmatpush.msra.mxu0 0.0
        %389 = vmatpush.msra.mxu0 0.0
        %390 = vmatpush.msra.mxu0 0.0
        %391 = vmatpush.msra.mxu0 0.0
        %392 = vmatpush.msra.mxu0 0.0
        %393 = vmatpush.msra.mxu0 0.0
        %394 = vmatpush.msra.mxu0 %v365
        %395 = vmatpush.msra.mxu0 %v364
        %396 = vmatpush.msra.mxu0 %v363
        %397 = vmatpush.msra.mxu0 %v362
        %398 = vmatmul.f32.gmra.mxu0 %v371
        %v399 = vpop.f32.mrf.mxu0
        %v400 = vadd.f32 %v368, %v399
        %401 = vmatmul.f32.gmra.mxu0 %v374
        %v402 = vpop.f32.mrf.mxu0
        %v403 = vadd.f32 %v368, %v402
        %404 = vmatmul.f32.gmra.mxu0 %v377
        %v405 = vpop.f32.mrf.mxu0
        %v406 = vadd.f32 %v368, %v405
        %407 = vmatmul.f32.gmra.mxu0 %v380
        %v408 = vpop.f32.mrf.mxu0
        %v409 = vadd.f32 %v368, %v408
        %410 = vdwg.mxu0
        %411 = vst.msk [vmem:[%s226] sm:$0xff] %vm250, %v400
        %412 = vst.msk [vmem:[%s226 + $0x8] sm:$0xff] %vm250, %v403
        %413 = vst.msk [vmem:[%s226 + $0x10] sm:$0xff] %vm250, %v406
        %414 = vst.msk [vmem:[%s226 + $0x18] sm:$0xff] %vm250, %v409
        %s415 = sand.u32 %s134, 1
        %s416 = sand.u32 %s134, 1
        %s417 = smul.addr %s416, 32
        %s418 = scalar_lea.vmem [#allocation2], %s417
        // Predicated region
        $region41: #{tpu_custom_call.1} parent=39 // pred_check
          %p419 = pneg %p144
        $region42: #{tpu_custom_call.1} parent=39 // pred_check_branch
          %421 = sbr.rel (%p419) target = $region44
        $region43: #{tpu_custom_call.1} parent=39 // pred_region
          %s422 = smul.u32 4, %s16
          %s423 = ssub.s32 13, %s422
          %p424 = scmp.lt.s32.totalorder %s423, 4
          %s425 = scalar_select %p424, %s423, 4
          %s426 = smul.u32 8, %s425
          %p427 = scmp.ne.s32.totalorder 0, %s426
          %s428 = smul.addr %s422, 8
          %s429 = scalar_lea.vmem %s5, %s428
          // Predicated region
          $region45: #{tpu_custom_call.1} parent=43 // pred_check
            %p430 = pneg %p427
          $region46: #{tpu_custom_call.1} parent=43 // pred_check_branch
            %432 = sbr.rel (%p430) target = $region48
          $region47: #{tpu_custom_call.1} parent=43 // pred_region
            // Predicated region
            $region49: #{tpu_custom_call.1} parent=47 // pred_check
              _
            $region50: #{tpu_custom_call.1} parent=47 // pred_check_branch
              %434 = sbr.rel (0) target = $region52
            $region51: #{tpu_custom_call.1} parent=47 // pred_region
              // Predicated region
              $region71: #{tpu_custom_call.1} parent=51 // pred_check
                _
              $region72: #{tpu_custom_call.1} parent=51 // pred_check_branch
                %490 = sbr.rel (0) target = $region74
              $region73: #{tpu_custom_call.1} parent=51 // pred_region
                %s491 = sshrl.u32 %s425, 2
                // While loop
                $region75: #{tpu_custom_call.1} parent=73 // loop_pre_header
                  _
                $region76: #{tpu_custom_call.1} parent=73 // loop_header
                  %s493 = sphi 0, %s495
                  %p494 = scmp.ge.s32.totalorder %s493, %s491
                  %s498 = sphi 0, %s511
                  %s499 = sphi %s418, %s514
                  %s500 = sphi %s429, %s515
                $region77: #{tpu_custom_call.1} parent=73 // loop_header_branch
                  %497 = sbr.rel (%p494) target = $region81
                $region78: #{tpu_custom_call.1} parent=73 // loop_body
                  %v501 = vld [vmem:[%s499] sm:$0xff]
                  %502 = vst [vmem:[%s500] sm:$0xff] %v501
                  %v503 = vld [vmem:[%s499 + $0x8] sm:$0xff]
                  %504 = vst [vmem:[%s500 + $0x8] sm:$0xff] %v503
                  %v505 = vld [vmem:[%s499 + $0x10] sm:$0xff]
                  %506 = vst [vmem:[%s500 + $0x10] sm:$0xff] %v505
                  %v507 = vld [vmem:[%s499 + $0x18] sm:$0xff]
                  %508 = vst [vmem:[%s500 + $0x18] sm:$0xff] %v507
                  %s509 = sadd.s32 1, %s498
                  %p510 = scmp.ge.s32.totalorder %s509, %s491
                  %s511 = scalar_select %p510, 0, %s509
                  %s512 = smul.u32 %s511, 32
                  %s513 = smul.u32 %s511, 32
                  %s514 = scalar_lea.vmem %s418, %s512 [#allocation2]
                  %s515 = scalar_lea.vmem %s429, %s513
                $region79: #{tpu_custom_call.1} parent=73 // loop_footer
                  %s495 = sadd.s32 %s493, 1
                $region80: #{tpu_custom_call.1} parent=73 // loop_footer_branch
                  %492 = sbr.rel target = $region76
                $region81: #{tpu_custom_call.1} parent=73 // loop_exit
                  _
                %s516 = sshrl.u32 %s425, 2
                %s517 = sand.u32 %s425, 3
                %s518 = smul.u32 %s516, 4
                %s519 = smul.u32 8, %s518
                %s520 = scalar_lea.vmem %s418, %s519 [#allocation2]
                %s521 = smul.u32 8, %s518
                %s522 = scalar_lea.vmem %s429, %s521
                // While loop
                $region82: #{tpu_custom_call.1} parent=73 // loop_pre_header
                  _
                $region83: #{tpu_custom_call.1} parent=73 // loop_header
                  %s524 = sphi 0, %s526
                  %p525 = scmp.ge.s32.totalorder %s524, %s517
                  %s529 = sphi 0, %s536
                  %s530 = sphi %s520, %s539
                  %s531 = sphi %s522, %s540
                $region84: #{tpu_custom_call.1} parent=73 // loop_header_branch
                  %528 = sbr.rel (%p525) target = $region88
                $region85: #{tpu_custom_call.1} parent=73 // loop_body
                  %v532 = vld [vmem:[%s530] sm:$0xff]
                  %533 = vst [vmem:[%s531] sm:$0xff] %v532
                  %s534 = sadd.s32 1, %s529
                  %p535 = scmp.ge.s32.totalorder %s534, %s517
                  %s536 = scalar_select %p535, 0, %s534
                  %s537 = smul.u32 %s536, 8
                  %s538 = smul.u32 %s536, 8
                  %s539 = scalar_lea.vmem %s520, %s537 [#allocation2]
                  %s540 = scalar_lea.vmem %s522, %s538
                $region86: #{tpu_custom_call.1} parent=73 // loop_footer
                  %s526 = sadd.s32 %s524, 1
                $region87: #{tpu_custom_call.1} parent=73 // loop_footer_branch
                  %523 = sbr.rel target = $region83
                $region88: #{tpu_custom_call.1} parent=73 // loop_exit
                  _
              $region74: #{tpu_custom_call.1} parent=51 // pred_fallthru
                _
              // Predicated region
              $region89: #{tpu_custom_call.1} parent=51 // pred_check
                _
              $region90: #{tpu_custom_call.1} parent=51 // pred_check_branch
                %542 = sbr.rel target = $region92
              $region91: #{tpu_custom_call.1} parent=51 // pred_region
                _
              $region92: #{tpu_custom_call.1} parent=51 // pred_fallthru
                _
            $region52: #{tpu_custom_call.1} parent=47 // pred_fallthru
              _
            // Predicated region
            $region53: #{tpu_custom_call.1} parent=47 // pred_check
              _
            $region54: #{tpu_custom_call.1} parent=47 // pred_check_branch
              %436 = sbr.rel target = $region56
            $region55: #{tpu_custom_call.1} parent=47 // pred_region
              %s438 = ssub.s32 256, 1
              %s439 = sshrl.u32 %s425, 2
              // While loop
              $region57: #{tpu_custom_call.1} parent=55 // loop_pre_header
                _
              $region58: #{tpu_custom_call.1} parent=55 // loop_header
                %s441 = sphi 0, %s443
                %p442 = scmp.ge.s32.totalorder %s441, %s439
                %s446 = sphi 0, %s459
                %s447 = sphi %s418, %s462
                %s448 = sphi %s429, %s463
              $region59: #{tpu_custom_call.1} parent=55 // loop_header_branch
                %445 = sbr.rel (%p442) target = $region63
              $region60: #{tpu_custom_call.1} parent=55 // loop_body
                %v449 = vld [vmem:[%s447] sm:%s438]
                %450 = vst [vmem:[%s448] sm:%s438] %v449
                %v451 = vld [vmem:[%s447 + $0x8] sm:%s438]
                %452 = vst [vmem:[%s448 + $0x8] sm:%s438] %v451
                %v453 = vld [vmem:[%s447 + $0x10] sm:%s438]
                %454 = vst [vmem:[%s448 + $0x10] sm:%s438] %v453
                %v455 = vld [vmem:[%s447 + $0x18] sm:%s438]
                %456 = vst [vmem:[%s448 + $0x18] sm:%s438] %v455
                %s457 = sadd.s32 1, %s446
                %p458 = scmp.ge.s32.totalorder %s457, %s439
                %s459 = scalar_select %p458, 0, %s457
                %s460 = smul.u32 %s459, 32
                %s461 = smul.u32 %s459, 32
                %s462 = scalar_lea.vmem %s418, %s460 [#allocation2]
                %s463 = scalar_lea.vmem %s429, %s461
              $region61: #{tpu_custom_call.1} parent=55 // loop_footer
                %s443 = sadd.s32 %s441, 1
              $region62: #{tpu_custom_call.1} parent=55 // loop_footer_branch
                %440 = sbr.rel target = $region58
              $region63: #{tpu_custom_call.1} parent=55 // loop_exit
                _
              %s464 = sshrl.u32 %s425, 2
              %s465 = sand.u32 %s425, 3
              %s466 = smul.u32 %s464, 4
              %s467 = smul.u32 8, %s466
              %s468 = scalar_lea.vmem %s418, %s467 [#allocation2]
              %s469 = smul.u32 8, %s466
              %s470 = scalar_lea.vmem %s429, %s469
              // While loop
              $region64: #{tpu_custom_call.1} parent=55 // loop_pre_header
                _
              $region65: #{tpu_custom_call.1} parent=55 // loop_header
                %s472 = sphi 0, %s474
                %p473 = scmp.ge.s32.totalorder %s472, %s465
                %s477 = sphi 0, %s484
                %s478 = sphi %s468, %s487
                %s479 = sphi %s470, %s488
              $region66: #{tpu_custom_call.1} parent=55 // loop_header_branch
                %476 = sbr.rel (%p473) target = $region70
              $region67: #{tpu_custom_call.1} parent=55 // loop_body
                %v480 = vld [vmem:[%s478] sm:%s438]
                %481 = vst [vmem:[%s479] sm:%s438] %v480
                %s482 = sadd.s32 1, %s477
                %p483 = scmp.ge.s32.totalorder %s482, %s465
                %s484 = scalar_select %p483, 0, %s482
                %s485 = smul.u32 %s484, 8
                %s486 = smul.u32 %s484, 8
                %s487 = scalar_lea.vmem %s468, %s485 [#allocation2]
                %s488 = scalar_lea.vmem %s470, %s486
              $region68: #{tpu_custom_call.1} parent=55 // loop_footer
                %s474 = sadd.s32 %s472, 1
              $region69: #{tpu_custom_call.1} parent=55 // loop_footer_branch
                %471 = sbr.rel target = $region65
              $region70: #{tpu_custom_call.1} parent=55 // loop_exit
                _
            $region56: #{tpu_custom_call.1} parent=47 // pred_fallthru
              _
          $region48: #{tpu_custom_call.1} parent=43 // pred_fallthru
            _
          %543 = vnop
        $region44: #{tpu_custom_call.1} parent=39 // pred_fallthru
          _
      $region40: #{tpu_custom_call.1} parent=5 // pred_fallthru
        _
      %p544 = scmp.le.s32.totalorder 2, %s11
      // Predicated region
      $region93: #{tpu_custom_call.1} parent=5 // pred_check
        %p545 = pneg %p544
      $region94: #{tpu_custom_call.1} parent=5 // pred_check_branch
        %547 = sbr.rel (%p545) target = $region96
      $region95: #{tpu_custom_call.1} parent=5 // pred_region
        %s548 = ssub.s32 %s11, 2
        // Predicated region
        $region97: #{tpu_custom_call.1} parent=95 // pred_check
          %p549 = pneg %p150
        $region98: #{tpu_custom_call.1} parent=95 // pred_check_branch
          %551 = sbr.rel (%p549) target = $region100
        $region99: #{tpu_custom_call.1} parent=95 // pred_region
          %s552 = sand.u32 %s135, 1
          %s553 = sand.u32 %s135, 1
          %s554 = smul.addr %s553, 32
          %s555 = scalar_lea.vmem [#allocation2], %s554
        $region100: #{tpu_custom_call.1} parent=95 // pred_fallthru
          _
      $region96: #{tpu_custom_call.1} parent=5 // pred_fallthru
        _
    $region6: #{tpu_custom_call.1} parent=1 // loop_footer
      %s15 = sadd.s32 1, %s11
    $region7: #{tpu_custom_call.1} parent=1 // loop_footer_branch
      %10 = sbr.rel target = $region3
    $region8: #{tpu_custom_call.1} parent=1 // loop_exit
      _

// kernel: tpu_custom_call.1
$region0: #{tpu_custom_call.1}
  #allocation0 [shape = 'u32[]', space=smem, size = 0x4, offset = 0x4, fixed_abs, tag = 'smem constant byte address 0x4 - core index']
  #allocation1 [shape = 'u32[72,128]{1,0:T(1,128)}', space=vmem, size = 0x9000, scoped, tag = 'internal scratch']
  %s0 = inlined_call_operand.vmem [shape: f32[100,32], index: 0, kind: input, shape index: {}]
  %s1 = inlined_call_operand.vmem [shape: f32[1,32], index: 1, kind: input, shape index: {}]
  %s2 = inlined_call_operand.vmem [shape: f32[1,32], index: 2, kind: input, shape index: {}]
  %s3 = inlined_call_operand.vmem [shape: f32[32,32], index: 3, kind: input, shape index: {}]
  %s4 = inlined_call_operand.vmem [shape: f32[1,32], index: 4, kind: input, shape index: {}]
  %s5 = inlined_call_operand.vmem [shape: f32[100,32], index: 5, kind: output, shape index: {}]
  %s6 = sld [smem:[#allocation0]]
  $region101: #{tpu_custom_call.1} parent=0
    _
  %s8 = ssub.s32 1, %s6
  %s9 = scalar_select 0, %s8, %s6
  $region1: #{tpu_custom_call.1} parent=0
    #allocation2 [shape = 'u8[32768]{0}', space=vmem, size = 0x8000, scoped, tag = 'output window, operand 0']
    loop: start=0, step=1, limit=6
    $region2: #{tpu_custom_call.1} parent=1 // loop_pre_header
      _
    $region3: #{tpu_custom_call.1} parent=1 // loop_header
      %s11 = sphi 0, %s15
      %p12 = scmp.ge.s32.totalorder %s11, 6
      %s21 = sphi 0, %s23
      %s24 = sphi 0, %s21
      %s25 = sphi 0, %s24
      %s41 = sphi 0, %s25
      %s45 = sphi 0, %s45
      %s47 = sphi 0, %s45
      %s48 = sphi 0, %s47
      %s62 = sphi 0, %s48
      %s66 = sphi 0, %s66
      %s68 = sphi 0, %s66
      %s69 = sphi 0, %s68
      %s83 = sphi 0, %s69
      %s87 = sphi 0, %s87
      %s89 = sphi 0, %s87
      %s90 = sphi 0, %s89
      %s104 = sphi 0, %s90
      %s108 = sphi 0, %s108
      %s110 = sphi 0, %s108
      %s111 = sphi 0, %s110
      %s125 = sphi 0, %s111
      %s131 = sphi 0, %s133
      %s134 = sphi 0, %s131
      %s135 = sphi 0, %s134
      %s151 = sphi 0, %s135
    $region4: #{tpu_custom_call.1} parent=1 // loop_header_branch
      %14 = sbr.rel (%p12) target = $region8
    $region5: #{tpu_custom_call.1} parent=1 // loop_body
      %s16 = ssub.s32 %s11, 1
      %s17 = ssub.s32 %s11, 2
      %s18 = sadd.s32 %s11, 1
      %s19 = ssub.s32 %s11, %s18
      %p20 = scmp.eq.s32.totalorder %s19, 0
      %s22 = sadd.s32 %s21, 1
      %s23 = scalar_select %p20, %s21, %s22
      %p26 = pneg %p20
      %p27 = scmp.eq.s32.totalorder %s11, 3
      %p28 = por %p26, %p27
      %p29 = scmp.ne.s32.totalorder %s21, %s24
      %p30 = scmp.eq.s32.totalorder %s11, 0
      %p31 = por %p29, %p30
      %p32 = scmp.ne.s32.totalorder %s21, %s24
      %p33 = scmp.eq.s32.totalorder %s16, 3
      %p34 = por %p32, %p33
      %p35 = scmp.ne.s32.totalorder %s24, %s25
      %p36 = scmp.eq.s32.totalorder %s16, 0
      %p37 = por %p35, %p36
      %p38 = scmp.ne.s32.totalorder %s24, %s25
      %p39 = scmp.eq.s32.totalorder %s17, 3
      %p40 = por %p38, %p39
      %p42 = scmp.ne.s32.totalorder %s25, %s41
      %p43 = scmp.eq.s32.totalorder %s17, 0
      %p44 = por %p42, %p43
      %s46 = sadd.s32 %s45, 1
      %p49 = scmp.eq.s32.totalorder %s11, 3
      %p50 = scmp.ne.s32.totalorder %s45, %s47
      %p51 = scmp.eq.s32.totalorder %s11, 0
      %p52 = por %p50, %p51
      %p53 = scmp.ne.s32.totalorder %s45, %s47
      %p54 = scmp.eq.s32.totalorder %s16, 3
      %p55 = por %p53, %p54
      %p56 = scmp.ne.s32.totalorder %s47, %s48
      %p57 = scmp.eq.s32.totalorder %s16, 0
      %p58 = por %p56, %p57
      %p59 = scmp.ne.s32.totalorder %s47, %s48
      %p60 = scmp.eq.s32.totalorder %s17, 3
      %p61 = por %p59, %p60
      %p63 = scmp.ne.s32.totalorder %s48, %s62
      %p64 = scmp.eq.s32.totalorder %s17, 0
      %p65 = por %p63, %p64
      %s67 = sadd.s32 %s66, 1
      %p70 = scmp.eq.s32.totalorder %s11, 3
      %p71 = scmp.ne.s32.totalorder %s66, %s68
      %p72 = scmp.eq.s32.totalorder %s11, 0
      %p73 = por %p71, %p72
      %p74 = scmp.ne.s32.totalorder %s66, %s68
      %p75 = scmp.eq.s32.totalorder %s16, 3
      %p76 = por %p74, %p75
      %p77 = scmp.ne.s32.totalorder %s68, %s69
      %p78 = scmp.eq.s32.totalorder %s16, 0
      %p79 = por %p77, %p78
      %p80 = scmp.ne.s32.totalorder %s68, %s69
      %p81 = scmp.eq.s32.totalorder %s17, 3
      %p82 = por %p80, %p81
      %p84 = scmp.ne.s32.totalorder %s69, %s83
      %p85 = scmp.eq.s32.totalorder %s17, 0
      %p86 = por %p84, %p85
      %s88 = sadd.s32 %s87, 1
      %p91 = scmp.eq.s32.totalorder %s11, 3
      %p92 = scmp.ne.s32.totalorder %s87, %s89
      %p93 = scmp.eq.s32.totalorder %s11, 0
      %p94 = por %p92, %p93
      %p95 = scmp.ne.s32.totalorder %s87, %s89
      %p96 = scmp.eq.s32.totalorder %s16, 3
      %p97 = por %p95, %p96
      %p98 = scmp.ne.s32.totalorder %s89, %s90
      %p99 = scmp.eq.s32.totalorder %s16, 0
      %p100 = por %p98, %p99
      %p101 = scmp.ne.s32.totalorder %s89, %s90
      %p102 = scmp.eq.s32.totalorder %s17, 3
      %p103 = por %p101, %p102
      %p105 = scmp.ne.s32.totalorder %s90, %s104
      %p106 = scmp.eq.s32.totalorder %s17, 0
      %p107 = por %p105, %p106
      %s109 = sadd.s32 %s108, 1
      %p112 = scmp.eq.s32.totalorder %s11, 3
      %p113 = scmp.ne.s32.totalorder %s108, %s110
      %p114 = scmp.eq.s32.totalorder %s11, 0
      %p115 = por %p113, %p114
      %p116 = scmp.ne.s32.totalorder %s108, %s110
      %p117 = scmp.eq.s32.totalorder %s16, 3
      %p118 = por %p116, %p117
      %p119 = scmp.ne.s32.totalorder %s110, %s111
      %p120 = scmp.eq.s32.totalorder %s16, 0
      %p121 = por %p119, %p120
      %p122 = scmp.ne.s32.totalorder %s110, %s111
      %p123 = scmp.eq.s32.totalorder %s17, 3
      %p124 = por %p122, %p123
      %p126 = scmp.ne.s32.totalorder %s111, %s125
      %p127 = scmp.eq.s32.totalorder %s17, 0
      %p128 = por %p126, %p127
      %s129 = ssub.s32 %s11, %s18
      %p130 = scmp.eq.s32.totalorder %s129, 0
      %s132 = sadd.s32 %s131, 1
      %s133 = scalar_select %p130, %s131, %s132
      %p136 = pneg %p130
      %p137 = scmp.eq.s32.totalorder %s11, 3
      %p138 = por %p136, %p137
      %p139 = scmp.ne.s32.totalorder %s131, %s134
      %p140 = scmp.eq.s32.totalorder %s11, 0
      %p141 = por %p139, %p140
      %p142 = scmp.ne.s32.totalorder %s131, %s134
      %p143 = scmp.eq.s32.totalorder %s16, 3
      %p144 = por %p142, %p143
      %p145 = scmp.ne.s32.totalorder %s134, %s135
      %p146 = scmp.eq.s32.totalorder %s16, 0
      %p147 = por %p145, %p146
      %p148 = scmp.ne.s32.totalorder %s134, %s135
      %p149 = scmp.eq.s32.totalorder %s17, 3
      %p150 = por %p148, %p149
      %p152 = scmp.ne.s32.totalorder %s135, %s151
      %p153 = scmp.eq.s32.totalorder %s17, 0
      %p154 = por %p152, %p153
      %p155 = scmp.le.s32.totalorder 1, %s11
      %p156 = scmp.lt.s32.totalorder %s11, 5
      %p157 = pnand %p155, %p156
      %p158 = pneg %p157
      // Predicated region
      $region9: #{tpu_custom_call.1} parent=5 // pred_check
        _
      $region10: #{tpu_custom_call.1} parent=5 // pred_check_branch
        %160 = sbr.rel (%p157) target = $region12
      $region11: #{tpu_custom_call.1} parent=5 // pred_region
        %s161 = ssub.s32 %s11, 1
        // Predicated region
        $region13: #{tpu_custom_call.1} parent=11 // pred_check
          %p162 = pneg %p58
        $region14: #{tpu_custom_call.1} parent=11 // pred_check_branch
          %164 = sbr.rel (%p162) target = $region16
        $region15: #{tpu_custom_call.1} parent=11 // pred_region
          _
        $region16: #{tpu_custom_call.1} parent=11 // pred_fallthru
          _
        // Predicated region
        $region17: #{tpu_custom_call.1} parent=11 // pred_check
          %p165 = pneg %p79
        $region18: #{tpu_custom_call.1} parent=11 // pred_check_branch
          %167 = sbr.rel (%p165) target = $region20
        $region19: #{tpu_custom_call.1} parent=11 // pred_region
          _
        $region20: #{tpu_custom_call.1} parent=11 // pred_fallthru
          _
        // Predicated region
        $region21: #{tpu_custom_call.1} parent=11 // pred_check
          %p168 = pneg %p100
        $region22: #{tpu_custom_call.1} parent=11 // pred_check_branch
          %170 = sbr.rel (%p168) target = $region24
        $region23: #{tpu_custom_call.1} parent=11 // pred_region
          _
        $region24: #{tpu_custom_call.1} parent=11 // pred_fallthru
          _
        // Predicated region
        $region25: #{tpu_custom_call.1} parent=11 // pred_check
          %p171 = pneg %p121
        $region26: #{tpu_custom_call.1} parent=11 // pred_check_branch
          %173 = sbr.rel (%p171) target = $region28
        $region27: #{tpu_custom_call.1} parent=11 // pred_region
          _
        $region28: #{tpu_custom_call.1} parent=11 // pred_fallthru
          _
      $region12: #{tpu_custom_call.1} parent=5 // pred_fallthru
        _
      %p174 = scmp.lt.s32.totalorder %s11, 4
      // Predicated region
      $region29: #{tpu_custom_call.1} parent=5 // pred_check
        %p175 = pneg %p174
      $region30: #{tpu_custom_call.1} parent=5 // pred_check_branch
        %177 = sbr.rel (%p175) target = $region32
      $region31: #{tpu_custom_call.1} parent=5 // pred_region
        // Predicated region
        $region33: #{tpu_custom_call.1} parent=31 // pred_check
          %p178 = pneg %p31
        $region34: #{tpu_custom_call.1} parent=31 // pred_check_branch
          %180 = sbr.rel (%p178) target = $region36
        $region35: #{tpu_custom_call.1} parent=31 // pred_region
          %s181 = smul.u32 4, %s11
          %s182 = ssub.s32 13, %s181
          %p183 = scmp.lt.s32.totalorder %s182, 4
          %s184 = scalar_select %p183, %s182, 4
          %s185 = smul.u32 8, %s184
          %p186 = scmp.lt.s32.totalorder %s181, 12
          %s187 = scalar_select %p186, %s181, 12
          %s188 = smul.addr %s187, 8
          %s189 = scalar_lea.vmem %s0, %s188
          %s190 = smul.u32 4, %s11
          %s191 = ssub.s32 13, %s190
          %p192 = scmp.lt.s32.totalorder %s191, 4
          %s193 = scalar_select %p192, %s191, 4
          %s194 = smul.u32 8, %s193
        $region36: #{tpu_custom_call.1} parent=31 // pred_fallthru
          _
      $region32: #{tpu_custom_call.1} parent=5 // pred_fallthru
        _
      %p195 = scmp.le.s32.totalorder 1, %s11
      %p196 = scmp.lt.s32.totalorder %s11, 5
      %p197 = pnand %p195, %p196
      %p198 = pneg %p197
      // Predicated region
      $region37: #{tpu_custom_call.1} parent=5 // pred_check
        _
      $region38: #{tpu_custom_call.1} parent=5 // pred_check_branch
        %200 = sbr.rel (%p197) target = $region40
      $region39: #{tpu_custom_call.1} parent=5 // pred_region
        %s201 = ssub.s32 %s11, 1
        %s202 = smul.u32 4, %s16
        %s203 = ssub.s32 13, %s202
        %p204 = scmp.lt.s32.totalorder %s203, 4
        %s205 = scalar_select %p204, %s203, 4
        %s206 = smul.u32 8, %s205
        %p207 = scmp.lt.s32.totalorder %s202, 12
        %s208 = scalar_select %p207, %s202, 12
        %s209 = smul.addr %s208, 8
        %s210 = scalar_lea.vmem %s0, %s209
        %p211 = pneg %p37
        %p212 = pneg %p34
        %p213 = pneg %p58
        %p214 = pneg %p55
        %p215 = pneg %p79
        %p216 = pneg %p76
        %p217 = pneg %p100
        %p218 = pneg %p97
        %p219 = pneg %p121
        %p220 = pneg %p118
        %p221 = pneg %p147
        %p222 = pneg %p144
        %s223 = sand.u32 %s134, 1
        %s224 = sand.u32 %s134, 1
        %s225 = smul.addr %s224, 32
        %s226 = scalar_lea.vmem [#allocation2], %s225
        %s227 = smul.u32 4, %s16
        %s228 = ssub.s32 13, %s227
        %p229 = scmp.lt.s32.totalorder %s228, 4
        %s230 = scalar_select %p229, %s228, 4
        %s231 = smul.u32 8, %s230
        %p232 = scmp.lt.s32.totalorder %s227, 12
        %s233 = scalar_select %p232, %s227, 12
        %s234 = smul.addr %s233, 8
        %s235 = scalar_lea.vmem %s0, %s234
        %s236 = smul.u32 4, %s16
        %s237 = ssub.s32 13, %s236
        %p238 = scmp.lt.s32.totalorder %s237, 4
        %s239 = scalar_select %p238, %s237, 4
        %s240 = smul.u32 8, %s239
        %s241 = smul.u32 4, %s16
        %s242 = ssub.s32 13, %s241
        %p243 = scmp.lt.s32.totalorder %s242, 4
        %s244 = scalar_select %p243, %s242, 4
        %s245 = smul.u32 8, %s244
        %v246 = vld [vmem:[%s235] sm:$0xff]
        %v247 = vld [vmem:[%s235 + $0x8] sm:$0xff]
        %v248 = vld [vmem:[%s235 + $0x10] sm:$0xff]
        %v249 = vld [vmem:[%s235 + $0x18] sm:$0xff]
        %vm250 = vcmask 261120
        %v251 = vsel %vm250, %v246, 0.0
        %252 = vadd.xlane.f32.xlu0 %v251
        %v253 = vpop.xlane.xlu0 %252
        %v254 = vsel %vm250, %v247, 0.0
        %255 = vadd.xlane.f32.xlu0 %v254
        %v256 = vpop.xlane.xlu0 %255
        %v257 = vsel %vm250, %v248, 0.0
        %258 = vadd.xlane.f32.xlu0 %v257
        %v259 = vpop.xlane.xlu0 %258
        %v260 = vsel %vm250, %v249, 0.0
        %261 = vadd.xlane.f32.xlu0 %v260
        %v262 = vpop.xlane.xlu0 %261
        %v263 = vrcp.pop 32.0
        %v264 = vmul.f32 32.0, %v263
        %v265 = vsub.f32 1.0, %v264
        %v266 = vmul.f32 %v263, %v265
        %v267 = vadd.f32 %v263, %v266
        %vm268 = vweird.f32 %v263
        %v269 = vsel %vm268, %v263, %v267
        %v270 = vmul.f32 %v253, %v269
        %v271 = vmul.f32 %v256, %v269
        %v272 = vmul.f32 %v259, %v269
        %v273 = vmul.f32 %v262, %v269
        %v274 = vsub.f32 %v246, %v270
        %v275 = vsub.f32 %v247, %v271
        %v276 = vsub.f32 %v248, %v272
        %v277 = vsub.f32 %v249, %v273
        %v278 = vmul.f32 %v274, %v274
        %v279 = vmul.f32 %v275, %v275
        %v280 = vmul.f32 %v276, %v276
        %v281 = vmul.f32 %v277, %v277
        %v282 = vsel %vm250, %v278, 0.0
        %283 = vadd.xlane.f32.xlu0 %v282
        %v284 = vpop.xlane.xlu0 %283
        %v285 = vsel %vm250, %v279, 0.0
        %286 = vadd.xlane.f32.xlu0 %v285
        %v287 = vpop.xlane.xlu0 %286
        %v288 = vsel %vm250, %v280, 0.0
        %289 = vadd.xlane.f32.xlu0 %v288
        %v290 = vpop.xlane.xlu0 %289
        %v291 = vsel %vm250, %v281, 0.0
        %292 = vadd.xlane.f32.xlu0 %v291
        %v293 = vpop.xlane.xlu0 %292
        %v294 = vmul.f32 %v284, %v269
        %v295 = vmul.f32 %v287, %v269
        %v296 = vmul.f32 %v290, %v269
        %v297 = vmul.f32 %v293, %v269
        %v298 = vadd.f32 %v294, 1e-05
        %v299 = vadd.f32 %v295, 1e-05
        %v300 = vadd.f32 %v296, 1e-05
        %v301 = vadd.f32 %v297, 1e-05
        %v302 = vrsqrt.pop %v298
        %v303 = vmul.f32 %v302, %v298
        %v304 = vmul.f32 %v303, %v302
        %v305 = vmul.f32 0.5, %v304
        %v306 = vsub.f32 1.5, %v305
        %v307 = vmul.f32 %v302, %v306
        %vm308 = vweird.f32 %v298
        %vm309 = vweird.f32 %v302
        %vm310 = vmor %vm308, %vm309
        %v311 = vsel %vm310, %v302, %v307
        %v312 = vrsqrt.pop %v299
        %v313 = vmul.f32 %v312, %v299
        %v314 = vmul.f32 %v313, %v312
        %v315 = vmul.f32 0.5, %v314
        %v316 = vsub.f32 1.5, %v315
        %v317 = vmul.f32 %v312, %v316
        %vm318 = vweird.f32 %v299
        %vm319 = vweird.f32 %v312
        %vm320 = vmor %vm318, %vm319
        %v321 = vsel %vm320, %v312, %v317
        %v322 = vrsqrt.pop %v300
        %v323 = vmul.f32 %v322, %v300
        %v324 = vmul.f32 %v323, %v322
        %v325 = vmul.f32 0.5, %v324
        %v326 = vsub.f32 1.5, %v325
        %v327 = vmul.f32 %v322, %v326
        %vm328 = vweird.f32 %v300
        %vm329 = vweird.f32 %v322
        %vm330 = vmor %vm328, %vm329
        %v331 = vsel %vm330, %v322, %v327
        %v332 = vrsqrt.pop %v301
        %v333 = vmul.f32 %v332, %v301
        %v334 = vmul.f32 %v333, %v332
        %v335 = vmul.f32 0.5, %v334
        %v336 = vsub.f32 1.5, %v335
        %v337 = vmul.f32 %v332, %v336
        %vm338 = vweird.f32 %v301
        %vm339 = vweird.f32 %v332
        %vm340 = vmor %vm338, %vm339
        %v341 = vsel %vm340, %v332, %v337
        %v342 = vmul.f32 %v274, %v311
        %v343 = vmul.f32 %v275, %v321
        %v344 = vmul.f32 %v276, %v331
        %v345 = vmul.f32 %v277, %v341
        %v346 = vld [vmem:[%s1] sm:$0x1]
        %v348 = vperm.slane %v346, 0
        %v350 = vmul.f32 %v342, %v348
        %v351 = vmul.f32 %v343, %v348
        %v352 = vmul.f32 %v344, %v348
        %v353 = vmul.f32 %v345, %v348
        %v354 = vld [vmem:[%s2] sm:$0x1]
        %v356 = vperm.slane %v354, 0
        %v358 = vadd.f32 %v350, %v356
        %v359 = vadd.f32 %v351, %v356
        %v360 = vadd.f32 %v352, %v356
        %v361 = vadd.f32 %v353, %v356
        %v362 = vld [vmem:[%s3] sm:$0xff]
        %v363 = vld [vmem:[%s3 + $0x8] sm:$0xff]
        %v364 = vld [vmem:[%s3 + $0x10] sm:$0xff]
        %v365 = vld [vmem:[%s3 + $0x18] sm:$0xff]
        %v366 = vld [vmem:[%s4] sm:$0x1]
        %v368 = vperm.slane %v366, 0
        %v371 = vsel %vm250, %v358, 0
        %v374 = vsel %vm250, %v359, 0
        %v377 = vsel %vm250, %v360, 0
        %v380 = vsel %vm250, %v361, 0
        %382 = vmatpush.msra.mxu0 0.0
        %383 = vmatpush.msra.mxu0 0.0
        %384 = vmatpush.msra.mxu0 0.0
        %385 = vmatpush.msra.mxu0 0.0
        %386 = vmatpush.msra.mxu0 0.0
        %387 = vmatpush.msra.mxu0 0.0
        %388 = vmatpush.msra.mxu0 0.0
        %389 = vmatpush.msra.mxu0 0.0
        %390 = vmatpush.msra.mxu0 0.0
        %391 = vmatpush.msra.mxu0 0.0
        %392 = vmatpush.msra.mxu0 0.0
        %393 = vmatpush.msra.mxu0 0.0
        %394 = vmatpush.msra.mxu0 %v365
        %395 = vmatpush.msra.mxu0 %v364
        %396 = vmatpush.msra.mxu0 %v363
        %397 = vmatpush.msra.mxu0 %v362
        %398 = vmatmul.f32.gmra.mxu0 %v371
        %v399 = vpop.f32.mrf.mxu0
        %v400 = vadd.f32 %v368, %v399
        %401 = vmatmul.f32.gmra.mxu0 %v374
        %v402 = vpop.f32.mrf.mxu0
        %v403 = vadd.f32 %v368, %v402
        %404 = vmatmul.f32.gmra.mxu0 %v377
        %v405 = vpop.f32.mrf.mxu0
        %v406 = vadd.f32 %v368, %v405
        %407 = vmatmul.f32.gmra.mxu0 %v380
        %v408 = vpop.f32.mrf.mxu0
        %v409 = vadd.f32 %v368, %v408
        %410 = vdwg.mxu0
        %411 = vst.msk [vmem:[%s226] sm:$0xff] %vm250, %v400
        %412 = vst.msk [vmem:[%s226 + $0x8] sm:$0xff] %vm250, %v403
        %413 = vst.msk [vmem:[%s226 + $0x10] sm:$0xff] %vm250, %v406
        %414 = vst.msk [vmem:[%s226 + $0x18] sm:$0xff] %vm250, %v409
        %s415 = sand.u32 %s134, 1
        %s416 = sand.u32 %s134, 1
        %s417 = smul.addr %s416, 32
        %s418 = scalar_lea.vmem [#allocation2], %s417
        // Predicated region
        $region41: #{tpu_custom_call.1} parent=39 // pred_check
          %p419 = pneg %p144
        $region42: #{tpu_custom_call.1} parent=39 // pred_check_branch
          %421 = sbr.rel (%p419) target = $region44
        $region43: #{tpu_custom_call.1} parent=39 // pred_region
          %s422 = smul.u32 4, %s16
          %s423 = ssub.s32 13, %s422
          %p424 = scmp.lt.s32.totalorder %s423, 4
          %s425 = scalar_select %p424, %s423, 4
          %s426 = smul.u32 8, %s425
          %p427 = scmp.ne.s32.totalorder 0, %s426
          %s428 = smul.addr %s422, 8
          %s429 = scalar_lea.vmem %s5, %s428
          // Predicated region
          $region45: #{tpu_custom_call.1} parent=43 // pred_check
            %p430 = pneg %p427
          $region46: #{tpu_custom_call.1} parent=43 // pred_check_branch
            %432 = sbr.rel (%p430) target = $region48
          $region47: #{tpu_custom_call.1} parent=43 // pred_region
            // Predicated region
            $region49: #{tpu_custom_call.1} parent=47 // pred_check
              _
            $region50: #{tpu_custom_call.1} parent=47 // pred_check_branch
              %434 = sbr.rel (0) target = $region52
            $region51: #{tpu_custom_call.1} parent=47 // pred_region
              // Predicated region
              $region71: #{tpu_custom_call.1} parent=51 // pred_check
                _
              $region72: #{tpu_custom_call.1} parent=51 // pred_check_branch
                %490 = sbr.rel (0) target = $region74
              $region73: #{tpu_custom_call.1} parent=51 // pred_region
                %s491 = sshrl.u32 %s425, 2
                // While loop
                $region75: #{tpu_custom_call.1} parent=73 // loop_pre_header
                  _
                $region76: #{tpu_custom_call.1} parent=73 // loop_header
                  %s493 = sphi 0, %s495
                  %p494 = scmp.ge.s32.totalorder %s493, %s491
                  %s498 = sphi 0, %s511
                  %s499 = sphi %s418, %s514
                  %s500 = sphi %s429, %s515
                $region77: #{tpu_custom_call.1} parent=73 // loop_header_branch
                  %497 = sbr.rel (%p494) target = $region81
                $region78: #{tpu_custom_call.1} parent=73 // loop_body
                  %v501 = vld [vmem:[%s499] sm:$0xff]
                  %502 = vst [vmem:[%s500] sm:$0xff] %v501
                  %v503 = vld [vmem:[%s499 + $0x8] sm:$0xff]
                  %504 = vst [vmem:[%s500 + $0x8] sm:$0xff] %v503
                  %v505 = vld [vmem:[%s499 + $0x10] sm:$0xff]
                  %506 = vst [vmem:[%s500 + $0x10] sm:$0xff] %v505
                  %v507 = vld [vmem:[%s499 + $0x18] sm:$0xff]
                  %508 = vst [vmem:[%s500 + $0x18] sm:$0xff] %v507
                  %s509 = sadd.s32 1, %s498
                  %p510 = scmp.ge.s32.totalorder %s509, %s491
                  %s511 = scalar_select %p510, 0, %s509
                  %s512 = smul.u32 %s511, 32
                  %s513 = smul.u32 %s511, 32
                  %s514 = scalar_lea.vmem %s418, %s512 [#allocation2]
                  %s515 = scalar_lea.vmem %s429, %s513
                $region79: #{tpu_custom_call.1} parent=73 // loop_footer
                  %s495 = sadd.s32 %s493, 1
                $region80: #{tpu_custom_call.1} parent=73 // loop_footer_branch
                  %492 = sbr.rel target = $region76
                $region81: #{tpu_custom_call.1} parent=73 // loop_exit
                  _
                %s516 = sshrl.u32 %s425, 2
                %s517 = sand.u32 %s425, 3
                %s518 = smul.u32 %s516, 4
                %s519 = smul.u32 8, %s518
                %s520 = scalar_lea.vmem %s418, %s519 [#allocation2]
                %s521 = smul.u32 8, %s518
                %s522 = scalar_lea.vmem %s429, %s521
                // While loop
                $region82: #{tpu_custom_call.1} parent=73 // loop_pre_header
                  _
                $region83: #{tpu_custom_call.1} parent=73 // loop_header
                  %s524 = sphi 0, %s526
                  %p525 = scmp.ge.s32.totalorder %s524, %s517
                  %s529 = sphi 0, %s536
                  %s530 = sphi %s520, %s539
                  %s531 = sphi %s522, %s540
                $region84: #{tpu_custom_call.1} parent=73 // loop_header_branch
                  %528 = sbr.rel (%p525) target = $region88
                $region85: #{tpu_custom_call.1} parent=73 // loop_body
                  %v532 = vld [vmem:[%s530] sm:$0xff]
                  %533 = vst [vmem:[%s531] sm:$0xff] %v532
                  %s534 = sadd.s32 1, %s529
                  %p535 = scmp.ge.s32.totalorder %s534, %s517
                  %s536 = scalar_select %p535, 0, %s534
                  %s537 = smul.u32 %s536, 8
                  %s538 = smul.u32 %s536, 8
                  %s539 = scalar_lea.vmem %s520, %s537 [#allocation2]
                  %s540 = scalar_lea.vmem %s522, %s538
                $region86: #{tpu_custom_call.1} parent=73 // loop_footer
                  %s526 = sadd.s32 %s524, 1
                $region87: #{tpu_custom_call.1} parent=73 // loop_footer_branch
                  %523 = sbr.rel target = $region83
                $region88: #{tpu_custom_call.1} parent=73 // loop_exit
                  _
              $region74: #{tpu_custom_call.1} parent=51 // pred_fallthru
                _
              // Predicated region
              $region89: #{tpu_custom_call.1} parent=51 // pred_check
                _
              $region90: #{tpu_custom_call.1} parent=51 // pred_check_branch
                %542 = sbr.rel target = $region92
              $region91: #{tpu_custom_call.1} parent=51 // pred_region
                _
              $region92: #{tpu_custom_call.1} parent=51 // pred_fallthru
                _
            $region52: #{tpu_custom_call.1} parent=47 // pred_fallthru
              _
            // Predicated region
            $region53: #{tpu_custom_call.1} parent=47 // pred_check
              _
            $region54: #{tpu_custom_call.1} parent=47 // pred_check_branch
              %436 = sbr.rel target = $region56
            $region55: #{tpu_custom_call.1} parent=47 // pred_region
              %s438 = ssub.s32 256, 1
              %s439 = sshrl.u32 %s425, 2
              // While loop
              $region57: #{tpu_custom_call.1} parent=55 // loop_pre_header
                _
              $region58: #{tpu_custom_call.1} parent=55 // loop_header
                %s441 = sphi 0, %s443
                %p442 = scmp.ge.s32.totalorder %s441, %s439
                %s446 = sphi 0, %s459
                %s447 = sphi %s418, %s462
                %s448 = sphi %s429, %s463
              $region59: #{tpu_custom_call.1} parent=55 // loop_header_branch
                %445 = sbr.rel (%p442) target = $region63
              $region60: #{tpu_custom_call.1} parent=55 // loop_body
                %v449 = vld [vmem:[%s447] sm:%s438]
                %450 = vst [vmem:[%s448] sm:%s438] %v449
                %v451 = vld [vmem:[%s447 + $0x8] sm:%s438]
                %452 = vst [vmem:[%s448 + $0x8] sm:%s438] %v451
                %v453 = vld [vmem:[%s447 + $0x10] sm:%s438]
                %454 = vst [vmem:[%s448 + $0x10] sm:%s438] %v453
                %v455 = vld [vmem:[%s447 + $0x18] sm:%s438]
                %456 = vst [vmem:[%s448 + $0x18] sm:%s438] %v455
                %s457 = sadd.s32 1, %s446
                %p458 = scmp.ge.s32.totalorder %s457, %s439
                %s459 = scalar_select %p458, 0, %s457
                %s460 = smul.u32 %s459, 32
                %s461 = smul.u32 %s459, 32
                %s462 = scalar_lea.vmem %s418, %s460 [#allocation2]
                %s463 = scalar_lea.vmem %s429, %s461
              $region61: #{tpu_custom_call.1} parent=55 // loop_footer
                %s443 = sadd.s32 %s441, 1
              $region62: #{tpu_custom_call.1} parent=55 // loop_footer_branch
                %440 = sbr.rel target = $region58
              $region63: #{tpu_custom_call.1} parent=55 // loop_exit
                _
              %s464 = sshrl.u32 %s425, 2
              %s465 = sand.u32 %s425, 3
              %s466 = smul.u32 %s464, 4
              %s467 = smul.u32 8, %s466
              %s468 = scalar_lea.vmem %s418, %s467 [#allocation2]
              %s469 = smul.u32 8, %s466
              %s470 = scalar_lea.vmem %s429, %s469
              // While loop
              $region64: #{tpu_custom_call.1} parent=55 // loop_pre_header
                _
              $region65: #{tpu_custom_call.1} parent=55 // loop_header
                %s472 = sphi 0, %s474
                %p473 = scmp.ge.s32.totalorder %s472, %s465
                %s477 = sphi 0, %s484
                %s478 = sphi %s468, %s487
                %s479 = sphi %s470, %s488
              $region66: #{tpu_custom_call.1} parent=55 // loop_header_branch
                %476 = sbr.rel (%p473) target = $region70
              $region67: #{tpu_custom_call.1} parent=55 // loop_body
                %v480 = vld [vmem:[%s478] sm:%s438]
                %481 = vst [vmem:[%s479] sm:%s438] %v480
                %s482 = sadd.s32 1, %s477
                %p483 = scmp.ge.s32.totalorder %s482, %s465
                %s484 = scalar_select %p483, 0, %s482
                %s485 = smul.u32 %s484, 8
                %s486 = smul.u32 %s484, 8
                %s487 = scalar_lea.vmem %s468, %s485 [#allocation2]
                %s488 = scalar_lea.vmem %s470, %s486
              $region68: #{tpu_custom_call.1} parent=55 // loop_footer
                %s474 = sadd.s32 %s472, 1
              $region69: #{tpu_custom_call.1} parent=55 // loop_footer_branch
                %471 = sbr.rel target = $region65
              $region70: #{tpu_custom_call.1} parent=55 // loop_exit
                _
            $region56: #{tpu_custom_call.1} parent=47 // pred_fallthru
              _
          $region48: #{tpu_custom_call.1} parent=43 // pred_fallthru
            _
          %543 = vnop
        $region44: #{tpu_custom_call.1} parent=39 // pred_fallthru
          _
      $region40: #{tpu_custom_call.1} parent=5 // pred_fallthru
        _
      %p544 = scmp.le.s32.totalorder 2, %s11
      // Predicated region
      $region93: #{tpu_custom_call.1} parent=5 // pred_check
        %p545 = pneg %p544
      $region94: #{tpu_custom_call.1} parent=5 // pred_check_branch
        %547 = sbr.rel (%p545) target = $region96
      $region95: #{tpu_custom_call.1} parent=5 // pred_region
        %s548 = ssub.s32 %s11, 2
        // Predicated region
        $region97: #{tpu_custom_call.1} parent=95 // pred_check
          %p549 = pneg %p150
        $region98: #{tpu_custom_call.1} parent=95 // pred_check_branch
          %551 = sbr.rel (%p549) target = $region100
        $region99: #{tpu_custom_call.1} parent=95 // pred_region
          %s552 = sand.u32 %s135, 1
          %s553 = sand.u32 %s135, 1
          %s554 = smul.addr %s553, 32
          %s555 = scalar_lea.vmem [#allocation2], %s554
        $region100: #{tpu_custom_call.1} parent=95 // pred_fallthru
          _
      $region96: #{tpu_custom_call.1} parent=5 // pred_fallthru
        _
    $region6: #{tpu_custom_call.1} parent=1 // loop_footer
      %s15 = sadd.s32 1, %s11
    $region7: #{tpu_custom_call.1} parent=1 // loop_footer_branch
      %10 = sbr.rel target = $region3
    $region8: #{tpu_custom_call.1} parent=1 // loop_exit
      _

</llo_original>
